<compile_context>
chip_gen: v6e
topology: v6e:2x2x1
jax: 0.10.0
libtpu: 0.0.40
codegen_flags: <defaults>
</compile_context>

<pallas_src>
import functools

import jax
import jax.numpy as jnp
from jax import lax
from jax.experimental import pallas as pl
from jax.experimental.pallas import tpu as pltpu


def _round_up(a: int, b: int) -> int:
    return (a + b - 1) // b * b


def _apply_activation(y, activation):
    if activation is None:
        return y
    if activation == "relu":
        return jnp.maximum(y, 0.0)
    # TODO(synk): arbitrary torch callables (module passes a callable) are not translatable.
    raise ValueError(f"unsupported activation: {activation}")


def _conv_tile(x_ref, w_ref, *, K, stride, tile_L):
    """Conv1d tile from a halo slice: K shifted matmuls, bf16 in, f32 accumulation."""
    acc = None
    for k in range(K):  # K is small and static -> unrolled, LLO-visible
        if stride == 1:
            xk = x_ref[:, pl.ds(k, tile_L)]
        else:
            xk = x_ref[:, pl.ds(k, tile_L, stride)]
        part = jnp.dot(w_ref[k], xk, preferred_element_type=jnp.float32)
        acc = part if acc is None else acc + part
    return acc  # (C_out_pad, tile_L) f32


def _stats_kernel(x_ref, w_ref, sum_ref, sumsq_ref, acc_y, acc_y2,
                  *, K, stride, tile_L, L_out, activation):
    j = pl.program_id(1)

    @pl.when(j == 0)
    def _init():
        acc_y[...] = jnp.zeros_like(acc_y)
        acc_y2[...] = jnp.zeros_like(acc_y2)

    y = _apply_activation(_conv_tile(x_ref, w_ref, K=K, stride=stride, tile_L=tile_L),
                          activation)

    # Padded output columns (t >= L_out) are NOT necessarily zero with halo tiles (boundary
    # windows still read real x data), so mask them out of the batch statistics. VPU-only.
    lane = lax.broadcasted_iota(jnp.int32, y.shape, 1)
    y = jnp.where(j * tile_L + lane < L_out, y, 0.0)

    # Elementwise (VPU) accumulation every step; XLU lane reductions only once per n-sweep.
    acc_y[...] += y
    acc_y2[...] += y * y

    @pl.when(j == pl.num_programs(1) - 1)
    def _finalize():
        sum_ref[...] = jnp.sum(acc_y[...], axis=1, keepdims=True)
        sumsq_ref[...] = jnp.sum(acc_y2[...], axis=1, keepdims=True)


def _normalize_kernel(x_ref, w_ref, scale_ref, shift_ref, o_ref,
                      *, K, stride, tile_L, activation):
    # Recompute the conv tile: with in-kernel im2col this only re-reads ~x (C_in rows),
    # cheaper in HBM than writing + re-reading a (C_out, L_out) intermediate for this
    # module's small channel counts.
    # TODO(synk): for C_out >> C_in the bf16-intermediate path would be less traffic.
    y = _apply_activation(_conv_tile(x_ref, w_ref, K=K, stride=stride, tile_L=tile_L),
                          activation)
    o_ref[...] = (y * scale_ref[...] + shift_ref[...]).astype(o_ref.dtype)


def batch_norm_conv1d(x, weight, gamma, beta, *, stride, padding, eps=1e-5,
                      activation=None, compute_dtype=jnp.bfloat16):
    """x: (N, C_in, L) f32, weight: (C_out, C_in, K), gamma/beta: (C_out,) -> (N, C_out, L_out).

    compute_dtype is an explicit precision choice for the conv operands (MXU); accumulation
    and all BatchNorm statistics stay in f32.
    """
    N, C_in, L = x.shape
    C_out, C_in_w, K = weight.shape
    assert C_in == C_in_w
    L_out = (L + 2 * padding - K) // stride + 1
    assert L_out > 0

    C_in_pad = _round_up(C_in, 16)    # bf16 sublane packing for the halo slab
    C_out_pad = _round_up(C_out, 8)   # f32 sublane granularity for output / accumulators

    # ---- tile selection: minimize L padding waste, fit comfortably in VMEM ------------
    def vmem_est(tl):
        halo = _round_up((tl - 1) * stride + K, 128)
        return (2 * C_in_pad * halo * 2            # x halo tile, double buffered, bf16
                + K * C_out_pad * C_in_pad * 2     # resident weights
                + 2 * C_out_pad * tl * 4           # output tile, double buffered, f32
                + 2 * C_out_pad * tl * 4)          # stats accumulators, f32

    desired = 2048
    while desired > 128 and vmem_est(desired) > 12 * 1024 * 1024:
        desired //= 2
    T_l = max(1, -(-L_out // desired))                 # number of L tiles
    tile_L = _round_up(-(-L_out // T_l), 128)          # lane-dense, minimal padding
    L_out_pad = T_l * tile_L
    halo_w = _round_up((tile_L - 1) * stride + K, 128)
    vmem_limit = int(min(max(2 * vmem_est(tile_L), 16 * 1024 * 1024), 40 * 1024 * 1024))

    # ---- per-tile halo slab (replaces the K x duplicated im2col slab) ------------------
    # halos[n, j, ci, p] = x_padded[n, ci, j*tile_L*stride + p]
    xp_len = (T_l - 1) * tile_L * stride + halo_w
    xp = jnp.pad(x, ((0, 0), (0, 0), (padding, xp_len - L - padding)))
    halos = jnp.stack(
        [lax.slice_in_dim(xp, j * tile_L * stride, j * tile_L * stride + halo_w, axis=2)
         for j in range(T_l)], axis=1)                                 # (N, T_l, C_in, halo_w)
    halos = jnp.pad(halos, ((0, 0), (0, 0), (0, C_in_pad - C_in), (0, 0))).astype(compute_dtype)

    wt = weight.transpose(2, 0, 1)                                      # (K, C_out, C_in)
    wt = jnp.pad(wt, ((0, 0), (0, C_out_pad - C_out), (0, C_in_pad - C_in))).astype(compute_dtype)

    x_spec = pl.BlockSpec((pl.Squeezed(), pl.Squeezed(), C_in_pad, halo_w),
                          lambda n, j: (n, j, 0, 0))
    w_spec = pl.BlockSpec((K, C_out_pad, C_in_pad), lambda n, j: (0, 0, 0))
    stat_spec = pl.BlockSpec((pl.Squeezed(), C_out_pad, 1), lambda n, j: (n, 0, 0))
    vec_spec = pl.BlockSpec((C_out_pad, 1), lambda n, j: (0, 0))
    out_spec = pl.BlockSpec((pl.Squeezed(), C_out_pad, tile_L), lambda n, j: (n, 0, j))

    # ---- pass 1: per-sample partial sum / sum-of-squares (N "parallel" -> megacore) ----
    stats_kernel = functools.partial(_stats_kernel, K=K, stride=stride, tile_L=tile_L,
                                     L_out=L_out, activation=activation)
    sums_n, sumsq_n = pl.pallas_call(
        stats_kernel,
        grid=(N, T_l),
        in_specs=[x_spec, w_spec],
        out_specs=(stat_spec, stat_spec),
        out_shape=(jax.ShapeDtypeStruct((N, C_out_pad, 1), jnp.float32),
                   jax.ShapeDtypeStruct((N, C_out_pad, 1), jnp.float32)),
        scratch_shapes=[pltpu.VMEM((C_out_pad, tile_L), jnp.float32),
                        pltpu.VMEM((C_out_pad, tile_L), jnp.float32)],
        compiler_params=pltpu.CompilerParams(
            dimension_semantics=("parallel", "arbitrary"),
            vmem_limit_bytes=vmem_limit),
    )(halos, wt)

    # ---- tiny XLA glue: reduce over N, fold BN into per-channel scale/shift once -------
    count = float(N * L_out)
    mean = jnp.sum(sums_n, axis=0) / count                               # (C_out_pad, 1)
    # TODO(synk): shifted / two-pass variance if E[x^2]-E[x]^2 cancellation ever bites.
    var = jnp.maximum(jnp.sum(sumsq_n, axis=0) / count - mean * mean, 0.0)
    gamma_p = jnp.pad(gamma.astype(jnp.float32), (0, C_out_pad - C_out)).reshape(C_out_pad, 1)
    beta_p = jnp.pad(beta.astype(jnp.float32), (0, C_out_pad - C_out)).reshape(C_out_pad, 1)
    scale = gamma_p * lax.rsqrt(var + eps)
    shift = beta_p - mean * scale

    # ---- pass 2: conv recompute + affine, lane-dense NCL output ("parallel"/"parallel") ----
    norm_kernel = functools.partial(_normalize_kernel, K=K, stride=stride, tile_L=tile_L,
                                    activation=activation)
    out = pl.pallas_call(
        norm_kernel,
        grid=(N, T_l),
        in_specs=[x_spec, w_spec, vec_spec, vec_spec],
        out_specs=out_spec,
        out_shape=jax.ShapeDtypeStruct((N, C_out_pad, L_out_pad), x.dtype),
        compiler_params=pltpu.CompilerParams(
            dimension_semantics=("parallel", "parallel"),
            vmem_limit_bytes=vmem_limit),
    )(halos, wt, scale, shift)

    # Only trim padding (no transpose): output is already (N, C_out, L_out)-ordered.
    return out[:, :C_out, :L_out]


def _reference(x, weight, gamma, beta, *, stride, padding, eps=1e-5, activation=None):
    y = lax.conv_general_dilated(
        x, weight, window_strides=(stride,), padding=[(padding, padding)],
        dimension_numbers=("NCH", "OIH", "NCH"), precision=lax.Precision.HIGHEST)
    if activation == "relu":
        y = jnp.maximum(y, 0.0)
    mean = jnp.mean(y, axis=(0, 2), keepdims=True)
    var = jnp.mean((y - mean) ** 2, axis=(0, 2), keepdims=True)
    y_hat = (y - mean) / jnp.sqrt(var + eps)
    return y_hat * gamma.reshape(1, -1, 1) + beta.reshape(1, -1, 1)


if __name__ == "__main__":
    # Module config (deterministic, synthetic): Conv1d(4 -> 8, kernel_size=3, stride=1,
    # padding=1, bias=False); BatchNorm1d(8) with default gamma=1, beta=0; activation=None.
    N, C_in, L = 2, 4, 16
    C_out, K, STRIDE, PAD = 8, 3, 1, 1

    key = jax.random.PRNGKey(0)
    kx, kw = jax.random.split(key)
    x = jax.random.normal(kx, (N, C_in, L), dtype=jnp.float32)
    bound = 1.0 / (C_in * K) ** 0.5
    weight = jax.random.uniform(kw, (C_out, C_in, K), jnp.float32, -bound, bound)
    # Round conv operands to bf16-representable values so the bf16 MXU path and the f32
    # reference see identical inputs (the kernel accumulates in f32 either way).
    x = x.astype(jnp.bfloat16).astype(jnp.float32)
    weight = weight.astype(jnp.bfloat16).astype(jnp.float32)
    gamma = jnp.ones((C_out,), jnp.float32)   # nn.BatchNorm1d default weight
    beta = jnp.zeros((C_out,), jnp.float32)   # nn.BatchNorm1d default bias

    y = batch_norm_conv1d(x, weight, gamma, beta, stride=STRIDE, padding=PAD, activation=None)
    y = jax.block_until_ready(y)

    y_ref = _reference(x, weight, gamma, beta, stride=STRIDE, padding=PAD, activation=None)
    L_out = (L + 2 * PAD - K) // STRIDE + 1
    assert y.shape == (N, C_out, L_out)
    assert jnp.allclose(y, y_ref, atol=1e-4, rtol=1e-4), "mismatch vs. JAX reference"

    print("KERNEL_OK")
</pallas_src>

<mosaic_0001>
module attributes {stable_mosaic.version = 11 : i64} {
  func.func @_stats_kernel(%arg0: i32, %arg1: i32, %arg2: memref<1x1x16x256xbf16, #tpu.memory_space<vmem>>, %arg3: memref<3x8x16xbf16, #tpu.memory_space<vmem>>, %arg4: memref<1x8x1xf32, #tpu.memory_space<vmem>>, %arg5: memref<1x8x1xf32, #tpu.memory_space<vmem>>, %arg6: memref<8x128xf32, #tpu.memory_space<vmem>>, %arg7: memref<8x128xf32, #tpu.memory_space<vmem>>) attributes {dimension_semantics = [#tpu.dimension_semantics<parallel>, #tpu.dimension_semantics<arbitrary>], iteration_bounds = array<i64: 2, 1>, scalar_prefetch = 0 : i64, scratch_operands = 2 : i64, tpu.core_type = #tpu.core_type<tc>, window_params = [{transform_indices = @transform_0, window_bounds = array<i64: 1, 1, 16, 256>}, {pipeline_mode = #tpu.pipeline_mode<synchronous>, transform_indices = @transform_1, window_bounds = array<i64: 3, 8, 16>}, {transform_indices = @transform_2, window_bounds = array<i64: 1, 8, 1>}, {transform_indices = @transform_3, window_bounds = array<i64: 1, 8, 1>}]} {
    %c0_i32 = arith.constant 0 : i32
    %0 = arith.cmpi eq, %arg1, %c0_i32 : i32
    %1 = arith.extui %0 : i1 to i32
    %c0_i32_0 = arith.constant 0 : i32
    %2 = arith.cmpi ne, %1, %c0_i32_0 : i32
    scf.if %2 {
      %cst_32 = arith.constant 0.000000e+00 : f32
      %38 = vector.broadcast %cst_32 : f32 to vector<8x128xf32>
      %c0_33 = arith.constant 0 : index
      %c0_34 = arith.constant 0 : index
      %39 = vector.load %arg6[%c0_33, %c0_34] : memref<8x128xf32, #tpu.memory_space<vmem>>, vector<8x128xf32>
      tpu.vector_store %arg6[%c0_33, %c0_34], %38 {strides = array<i32>} : memref<8x128xf32, #tpu.memory_space<vmem>>, vector<8x128xf32>,
      %cst_35 = arith.constant 0.000000e+00 : f32
      %40 = vector.broadcast %cst_35 : f32 to vector<8x128xf32>
      %c0_36 = arith.constant 0 : index
      %c0_37 = arith.constant 0 : index
      %41 = vector.load %arg7[%c0_36, %c0_37] : memref<8x128xf32, #tpu.memory_space<vmem>>, vector<8x128xf32>
      tpu.vector_store %arg7[%c0_36, %c0_37], %40 {strides = array<i32>} : memref<8x128xf32, #tpu.memory_space<vmem>>, vector<8x128xf32>,
    } else {
    }
    %c0 = arith.constant 0 : index
    %c0_1 = arith.constant 0 : index
    %c0_2 = arith.constant 0 : index
    %c0_3 = arith.constant 0 : index
    %3 = vector.load %arg2[%c0, %c0_1, %c0_2, %c0_3] : memref<1x1x16x256xbf16, #tpu.memory_space<vmem>>, vector<1x1x16x128xbf16>
    %4 = vector.shape_cast %3 : vector<1x1x16x128xbf16> to vector<16x128xbf16>
    %c0_4 = arith.constant 0 : index
    %c0_5 = arith.constant 0 : index
    %c0_6 = arith.constant 0 : index
    %5 = vector.load %arg3[%c0_4, %c0_5, %c0_6] : memref<3x8x16xbf16, #tpu.memory_space<vmem>>, vector<1x8x16xbf16>
    %6 = vector.shape_cast %5 : vector<1x8x16xbf16> to vector<8x16xbf16>
    %cst = arith.constant dense<0.000000e+00> : vector<8x128xf32>
    %7 = tpu.matmul %6, %4, %cst {dimension_numbers = #tpu.dot_dimension_numbers<[1], [0], [0], [1], [0, 0, 1, 1], [], []>} : vector<8x16xbf16>, vector<16x128xbf16>, vector<8x128xf32> -> vector<8x128xf32>
    %c0_7 = arith.constant 0 : index
    %c0_8 = arith.constant 0 : index
    %c0_9 = arith.constant 0 : index
    %c1 = arith.constant 1 : index
    %8 = vector.load %arg2[%c0_7, %c0_8, %c0_9, %c1] : memref<1x1x16x256xbf16, #tpu.memory_space<vmem>>, vector<1x1x16x128xbf16>
    %9 = vector.shape_cast %8 : vector<1x1x16x128xbf16> to vector<16x128xbf16>
    %c1_10 = arith.constant 1 : index
    %c0_11 = arith.constant 0 : index
    %c0_12 = arith.constant 0 : index
    %10 = vector.load %arg3[%c1_10, %c0_11, %c0_12] : memref<3x8x16xbf16, #tpu.memory_space<vmem>>, vector<1x8x16xbf16>
    %11 = vector.shape_cast %10 : vector<1x8x16xbf16> to vector<8x16xbf16>
    %cst_13 = arith.constant dense<0.000000e+00> : vector<8x128xf32>
    %12 = tpu.matmul %11, %9, %cst_13 {dimension_numbers = #tpu.dot_dimension_numbers<[1], [0], [0], [1], [0, 0, 1, 1], [], []>} : vector<8x16xbf16>, vector<16x128xbf16>, vector<8x128xf32> -> vector<8x128xf32>
    %13 = arith.addf %7, %12 : vector<8x128xf32>
    %c0_14 = arith.constant 0 : index
    %c0_15 = arith.constant 0 : index
    %c0_16 = arith.constant 0 : index
    %c2 = arith.constant 2 : index
    %14 = vector.load %arg2[%c0_14, %c0_15, %c0_16, %c2] : memref<1x1x16x256xbf16, #tpu.memory_space<vmem>>, vector<1x1x16x128xbf16>
    %15 = vector.shape_cast %14 : vector<1x1x16x128xbf16> to vector<16x128xbf16>
    %c2_17 = arith.constant 2 : index
    %c0_18 = arith.constant 0 : index
    %c0_19 = arith.constant 0 : index
    %16 = vector.load %arg3[%c2_17, %c0_18, %c0_19] : memref<3x8x16xbf16, #tpu.memory_space<vmem>>, vector<1x8x16xbf16>
    %17 = vector.shape_cast %16 : vector<1x8x16xbf16> to vector<8x16xbf16>
    %cst_20 = arith.constant dense<0.000000e+00> : vector<8x128xf32>
    %18 = tpu.matmul %17, %15, %cst_20 {dimension_numbers = #tpu.dot_dimension_numbers<[1], [0], [0], [1], [0, 0, 1, 1], [], []>} : vector<8x16xbf16>, vector<16x128xbf16>, vector<8x128xf32> -> vector<8x128xf32>
    %19 = arith.addf %13, %18 : vector<8x128xf32>
    %20 = tpu.iota {dimensions = array<i32: 1>} : vector<8x128xi32>
    %c128_i32 = arith.constant 128 : i32
    %21 = arith.muli %arg1, %c128_i32 : i32
    %22 = vector.broadcast %21 : i32 to vector<8x128xi32>
    %23 = arith.addi %22, %20 : vector<8x128xi32>
    %c16_i32 = arith.constant 16 : i32
    %24 = vector.broadcast %c16_i32 : i32 to vector<8x128xi32>
    %25 = arith.cmpi slt, %23, %24 : vector<8x128xi32>
    %cst_21 = arith.constant 0.000000e+00 : f32
    %26 = vector.broadcast %cst_21 : f32 to vector<8x128xf32>
    %27 = arith.select %25, %19, %26 : vector<8x128xi1>, vector<8x128xf32>
    %c0_22 = arith.constant 0 : index
    %c0_23 = arith.constant 0 : index
    %28 = vector.load %arg6[%c0_22, %c0_23] : memref<8x128xf32, #tpu.memory_space<vmem>>, vector<8x128xf32>
    %29 = arith.addf %28, %27 : vector<8x128xf32>
    %c0_24 = arith.constant 0 : index
    %c0_25 = arith.constant 0 : index
    %30 = vector.load %arg6[%c0_24, %c0_25] : memref<8x128xf32, #tpu.memory_space<vmem>>, vector<8x128xf32>
    tpu.vector_store %arg6[%c0_24, %c0_25], %29 {strides = array<i32>} : memref<8x128xf32, #tpu.memory_space<vmem>>, vector<8x128xf32>,
    %c0_26 = arith.constant 0 : index
    %c0_27 = arith.constant 0 : index
    %31 = vector.load %arg7[%c0_26, %c0_27] : memref<8x128xf32, #tpu.memory_space<vmem>>, vector<8x128xf32>
    %32 = arith.mulf %27, %27 : vector<8x128xf32>
    %33 = arith.addf %31, %32 : vector<8x128xf32>
    %c0_28 = arith.constant 0 : index
    %c0_29 = arith.constant 0 : index
    %34 = vector.load %arg7[%c0_28, %c0_29] : memref<8x128xf32, #tpu.memory_space<vmem>>, vector<8x128xf32>
    tpu.vector_store %arg7[%c0_28, %c0_29], %33 {strides = array<i32>} : memref<8x128xf32, #tpu.memory_space<vmem>>, vector<8x128xf32>,
    %c0_i32_30 = arith.constant 0 : i32
    %35 = arith.cmpi eq, %arg1, %c0_i32_30 : i32
    %36 = arith.extui %35 : i1 to i32
    %c0_i32_31 = arith.constant 0 : i32
    %37 = arith.cmpi ne, %36, %c0_i32_31 : i32
    scf.if %37 {
      %c0_32 = arith.constant 0 : index
      %c0_33 = arith.constant 0 : index
      %38 = vector.load %arg6[%c0_32, %c0_33] : memref<8x128xf32, #tpu.memory_space<vmem>>, vector<8x128xf32>
      %cst_34 = arith.constant dense<0.000000e+00> : vector<8xf32>
      %39 = vector.multi_reduction <add>, %38, %cst_34 [1] : vector<8x128xf32> to vector<8xf32>
      %40 = vector.shape_cast %39 : vector<8xf32> to vector<8x1xf32>
      %c0_35 = arith.constant 0 : index
      %c0_36 = arith.constant 0 : index
      %c0_37 = arith.constant 0 : index
      %41 = vector.load %arg4[%c0_35, %c0_36, %c0_37] : memref<1x8x1xf32, #tpu.memory_space<vmem>>, vector<1x8x1xf32>
      %42 = vector.shape_cast %41 : vector<1x8x1xf32> to vector<8x1xf32>
      %43 = vector.shape_cast %40 : vector<8x1xf32> to vector<1x8x1xf32>
      tpu.vector_store %arg4[%c0_35, %c0_36, %c0_37], %43 {strides = array<i32>} : memref<1x8x1xf32, #tpu.memory_space<vmem>>, vector<1x8x1xf32>,
      %c0_38 = arith.constant 0 : index
      %c0_39 = arith.constant 0 : index
      %44 = vector.load %arg7[%c0_38, %c0_39] : memref<8x128xf32, #tpu.memory_space<vmem>>, vector<8x128xf32>
      %cst_40 = arith.constant dense<0.000000e+00> : vector<8xf32>
      %45 = vector.multi_reduction <add>, %44, %cst_40 [1] : vector<8x128xf32> to vector<8xf32>
      %46 = vector.shape_cast %45 : vector<8xf32> to vector<8x1xf32>
      %c0_41 = arith.constant 0 : index
      %c0_42 = arith.constant 0 : index
      %c0_43 = arith.constant 0 : index
      %47 = vector.load %arg5[%c0_41, %c0_42, %c0_43] : memref<1x8x1xf32, #tpu.memory_space<vmem>>, vector<1x8x1xf32>
      %48 = vector.shape_cast %47 : vector<1x8x1xf32> to vector<8x1xf32>
      %49 = vector.shape_cast %46 : vector<8x1xf32> to vector<1x8x1xf32>
      tpu.vector_store %arg5[%c0_41, %c0_42, %c0_43], %49 {strides = array<i32>} : memref<1x8x1xf32, #tpu.memory_space<vmem>>, vector<1x8x1xf32>,
    } else {
    }
    return
  }
  func.func @transform_0(%arg0: i32, %arg1: i32) -> (i32, i32, i32, i32) {
    %c0_i32 = arith.constant 0 : i32
    %c0_i32_0 = arith.constant 0 : i32
    %c0_i32_1 = arith.constant 0 : i32
    return %arg0, %arg1, %c0_i32, %c0_i32_0 : i32, i32, i32, i32
  }
  func.func @transform_1(%arg0: i32, %arg1: i32) -> (i32, i32, i32) {
    %c0_i32 = arith.constant 0 : i32
    %c0_i32_0 = arith.constant 0 : i32
    %c0_i32_1 = arith.constant 0 : i32
    %c0_i32_2 = arith.constant 0 : i32
    return %c0_i32, %c0_i32_0, %c0_i32_1 : i32, i32, i32
  }
  func.func @transform_2(%arg0: i32, %arg1: i32) -> (i32, i32, i32) {
    %c0_i32 = arith.constant 0 : i32
    %c0_i32_0 = arith.constant 0 : i32
    %c0_i32_1 = arith.constant 0 : i32
    return %arg0, %c0_i32, %c0_i32_0 : i32, i32, i32
  }
  func.func @transform_3(%arg0: i32, %arg1: i32) -> (i32, i32, i32) {
    %c0_i32 = arith.constant 0 : i32
    %c0_i32_0 = arith.constant 0 : i32
    %c0_i32_1 = arith.constant 0 : i32
    return %arg0, %c0_i32, %c0_i32_0 : i32, i32, i32
  }
}

</mosaic_0001>

<llo_original>
// kernel: tpu_custom_call.1
$region0: #{tpu_custom_call.1}
  #allocation0 [shape = 'u32[]', space=smem, size = 0x4, offset = 0x4, fixed_abs, tag = 'smem constant byte address 0x4 - core index']
  #allocation1 [shape = 'u32[144,128]{1,0:T(1,128)}', space=vmem, size = 0x12000, scoped, tag = 'internal scratch']
  #allocation2 [shape = 'f32[8,128]{1,0:T(8,128)}', space=vmem, size = 0x1000, scoped, tag = 'scratch operand']
  #allocation3 [shape = 'f32[8,128]{1,0:T(8,128)}', space=vmem, size = 0x1000, scoped, tag = 'scratch operand']
  %s0 = inlined_call_operand.hbm [shape: bf16[2,1,16,256], index: 0, kind: input, shape index: {}]
  %s1 = inlined_call_operand.hbm [shape: bf16[3,8,16], index: 1, kind: input, shape index: {}]
  %s2 = inlined_call_operand.vmem [shape: f32[2,8,1], index: 2, kind: output, shape index: {0}]
  %s3 = inlined_call_operand.vmem [shape: f32[2,8,1], index: 3, kind: output, shape index: {1}]
  %4 = xla_tuple %s2, %s3
  %s5 = sld [smem:[#allocation0]]
  $region65: #{tpu_custom_call.1} parent=0
    _
  %s7 = ssub.s32 1, %s5
  %s8 = scalar_select 0, %s7, %s5
  $region1: #{tpu_custom_call.1} parent=0
    #allocation4 [shape = 'u8[16384]{0}', space=vmem, size = 0x4000, scoped, tag = 'input window, operand 0']
    #allocation5 [shape = 's32[2]{0}', space=sflag, size = 0x8, scoped, tag = 'scoped memory for tpu_custom_call.1']
    #allocation6 [shape = 'u8[6144]{0}', space=vmem, size = 0x1800, scoped, tag = 'input window, operand 1, single buffered']
    #allocation7 [shape = 's32[1]{0}', space=sflag, size = 0x4, scoped, tag = 'scoped memory for tpu_custom_call.1']
    %9 = vsyncpa [#allocation5], 0
    %s10 = scalar_lea.sflag [#allocation5], 1
    %11 = vsyncpa %s10, 0
    %12 = vsyncpa [#allocation7], 0
    loop: start=0, step=1, limit=4
    $region2: #{tpu_custom_call.1} parent=1 // loop_pre_header
      _
    $region3: #{tpu_custom_call.1} parent=1 // loop_header
      %s14 = sphi 0, %s18
      %p15 = scmp.ge.s32.totalorder %s14, 4
      %s21 = sphi 0, %s33
      %s22 = sphi 0, %s29
      %s23 = sphi 0, %s21
      %s24 = sphi 0, %s22
      %s25 = sphi 0, %s23
      %s26 = sphi 0, %s24
      %s38 = sphi 0, %s40
      %s41 = sphi 0, %s38
      %s42 = sphi 0, %s41
      %s58 = sphi 0, %s42
      %s62 = sphi 0, %s62
      %s64 = sphi 0, %s62
      %s65 = sphi 0, %s64
      %s79 = sphi 0, %s65
      %s85 = sphi 0, %s87
      %s88 = sphi 0, %s85
      %s89 = sphi 0, %s88
      %s105 = sphi 0, %s89
      %s111 = sphi 0, %s113
      %s114 = sphi 0, %s111
      %s115 = sphi 0, %s114
      %s131 = sphi 0, %s115
    $region4: #{tpu_custom_call.1} parent=1 // loop_header_branch
      %17 = sbr.rel (%p15) target = $region8
    $region5: #{tpu_custom_call.1} parent=1 // loop_body
      %s19 = ssub.s32 %s14, 1
      %s20 = ssub.s32 %s14, 2
      %s27 = sadd.s32 1, %s22
      %p28 = scmp.ge.s32.totalorder %s27, 1
      %s29 = scalar_select %p28, 0, %s27
      %s30 = sadd.s32 1, %s21
      %s31 = scalar_select %p28, %s30, %s21
      %p32 = scmp.ge.s32.totalorder %s31, 2
      %s33 = scalar_select %p32, 0, %s31
      %s34 = ssub.s32 %s21, %s33
      %s35 = ssub.s32 %s22, %s29
      %s36 = sor.u32 %s34, %s35
      %p37 = scmp.eq.s32.totalorder %s36, 0
      %s39 = sadd.s32 %s38, 1
      %s40 = scalar_select %p37, %s38, %s39
      %p43 = pneg %p37
      %p44 = scmp.eq.s32.totalorder %s14, 1
      %p45 = por %p43, %p44
      %p46 = scmp.ne.s32.totalorder %s38, %s41
      %p47 = scmp.eq.s32.totalorder %s14, 0
      %p48 = por %p46, %p47
      %p49 = scmp.ne.s32.totalorder %s38, %s41
      %p50 = scmp.eq.s32.totalorder %s19, 1
      %p51 = por %p49, %p50
      %p52 = scmp.ne.s32.totalorder %s41, %s42
      %p53 = scmp.eq.s32.totalorder %s19, 0
      %p54 = por %p52, %p53
      %p55 = scmp.ne.s32.totalorder %s41, %s42
      %p56 = scmp.eq.s32.totalorder %s20, 1
      %p57 = por %p55, %p56
      %p59 = scmp.ne.s32.totalorder %s42, %s58
      %p60 = scmp.eq.s32.totalorder %s20, 0
      %p61 = por %p59, %p60
      %s63 = sadd.s32 %s62, 1
      %p66 = scmp.eq.s32.totalorder %s14, 1
      %p67 = scmp.ne.s32.totalorder %s62, %s64
      %p68 = scmp.eq.s32.totalorder %s14, 0
      %p69 = por %p67, %p68
      %p70 = scmp.ne.s32.totalorder %s62, %s64
      %p71 = scmp.eq.s32.totalorder %s19, 1
      %p72 = por %p70, %p71
      %p73 = scmp.ne.s32.totalorder %s64, %s65
      %p74 = scmp.eq.s32.totalorder %s19, 0
      %p75 = por %p73, %p74
      %p76 = scmp.ne.s32.totalorder %s64, %s65
      %p77 = scmp.eq.s32.totalorder %s20, 1
      %p78 = por %p76, %p77
      %p80 = scmp.ne.s32.totalorder %s65, %s79
      %p81 = scmp.eq.s32.totalorder %s20, 0
      %p82 = por %p80, %p81
      %s83 = ssub.s32 %s21, %s33
      %p84 = scmp.eq.s32.totalorder %s83, 0
      %s86 = sadd.s32 %s85, 1
      %s87 = scalar_select %p84, %s85, %s86
      %p90 = pneg %p84
      %p91 = scmp.eq.s32.totalorder %s14, 1
      %p92 = por %p90, %p91
      %p93 = scmp.ne.s32.totalorder %s85, %s88
      %p94 = scmp.eq.s32.totalorder %s14, 0
      %p95 = por %p93, %p94
      %p96 = scmp.ne.s32.totalorder %s85, %s88
      %p97 = scmp.eq.s32.totalorder %s19, 1
      %p98 = por %p96, %p97
      %p99 = scmp.ne.s32.totalorder %s88, %s89
      %p100 = scmp.eq.s32.totalorder %s19, 0
      %p101 = por %p99, %p100
      %p102 = scmp.ne.s32.totalorder %s88, %s89
      %p103 = scmp.eq.s32.totalorder %s20, 1
      %p104 = por %p102, %p103
      %p106 = scmp.ne.s32.totalorder %s89, %s105
      %p107 = scmp.eq.s32.totalorder %s20, 0
      %p108 = por %p106, %p107
      %s109 = ssub.s32 %s21, %s33
      %p110 = scmp.eq.s32.totalorder %s109, 0
      %s112 = sadd.s32 %s111, 1
      %s113 = scalar_select %p110, %s111, %s112
      %p116 = pneg %p110
      %p117 = scmp.eq.s32.totalorder %s14, 1
      %p118 = por %p116, %p117
      %p119 = scmp.ne.s32.totalorder %s111, %s114
      %p120 = scmp.eq.s32.totalorder %s14, 0
      %p121 = por %p119, %p120
      %p122 = scmp.ne.s32.totalorder %s111, %s114
      %p123 = scmp.eq.s32.totalorder %s19, 1
      %p124 = por %p122, %p123
      %p125 = scmp.ne.s32.totalorder %s114, %s115
      %p126 = scmp.eq.s32.totalorder %s19, 0
      %p127 = por %p125, %p126
      %p128 = scmp.ne.s32.totalorder %s114, %s115
      %p129 = scmp.eq.s32.totalorder %s20, 1
      %p130 = por %p128, %p129
      %p132 = scmp.ne.s32.totalorder %s115, %s131
      %p133 = scmp.eq.s32.totalorder %s20, 0
      %p134 = por %p132, %p133
      %p135 = scmp.le.s32.totalorder 1, %s14
      %p136 = scmp.lt.s32.totalorder %s14, 3
      %p137 = pnand %p135, %p136
      %p138 = pneg %p137
      // Predicated region
      $region9: #{tpu_custom_call.1} parent=5 // pred_check
        _
      $region10: #{tpu_custom_call.1} parent=5 // pred_check_branch
        %140 = sbr.rel (%p137) target = $region12
      $region11: #{tpu_custom_call.1} parent=5 // pred_region
        %s141 = ssub.s32 %s14, 1
        // Predicated region
        $region13: #{tpu_custom_call.1} parent=11 // pred_check
          %p142 = pneg %p75
        $region14: #{tpu_custom_call.1} parent=11 // pred_check_branch
          %144 = sbr.rel (%p142) target = $region16
        $region15: #{tpu_custom_call.1} parent=11 // pred_region
          %s146 = ssub.s32 192, 192
          %147 = vsyncadd [#allocation7], %s146
          %s148 = sshll.u32 [#allocation6], 4
          %s149 = int_to_ptr.vmem [resolvable:$true] %s148
          %154 = dma.hbm_to_vmem [thread:$0]  %s1, 192, %s149, [#allocation7], 64, 64, 4
        $region16: #{tpu_custom_call.1} parent=11 // pred_fallthru
          _
      $region12: #{tpu_custom_call.1} parent=5 // pred_fallthru
        _
      %p155 = scmp.lt.s32.totalorder %s14, 2
      // Predicated region
      $region17: #{tpu_custom_call.1} parent=5 // pred_check
        %p156 = pneg %p155
      $region18: #{tpu_custom_call.1} parent=5 // pred_check_branch
        %158 = sbr.rel (%p156) target = $region20
      $region19: #{tpu_custom_call.1} parent=5 // pred_region
        // Predicated region
        $region21: #{tpu_custom_call.1} parent=19 // pred_check
          %p159 = pneg %p48
        $region22: #{tpu_custom_call.1} parent=19 // pred_check_branch
          %161 = sbr.rel (%p159) target = $region24
        $region23: #{tpu_custom_call.1} parent=19 // pred_region
          %s162 = sand.u32 %s38, 1
          %s163 = scalar_lea.sflag [#allocation5], %s162
          %s164 = sand.u32 %s38, 1
          %s165 = smul.addr %s164, 16
          %s166 = scalar_lea.vmem [#allocation4], %s165
          %s168 = ssub.s32 256, 256
          %169 = vsyncadd %s163, %s168
          %s170 = smul.addr %s22, 4
          %s171 = smul.addr %s21, 4
          %s172 = sadd.s32 %s170, %s171
          %s173 = smul.addr %s172, 64
          %s174 = scalar_lea.hbm %s0, %s173
          %s175 = sshll.u32 %s166, 4
          %s176 = int_to_ptr.vmem [resolvable:$true] %s175
          %181 = dma.hbm_to_vmem [thread:$0]  %s174, 256, %s176, %s163, 128, 128, 8
        $region24: #{tpu_custom_call.1} parent=19 // pred_fallthru
          _
      $region20: #{tpu_custom_call.1} parent=5 // pred_fallthru
        _
      %p182 = scmp.le.s32.totalorder 1, %s14
      %p183 = scmp.lt.s32.totalorder %s14, 3
      %p184 = pnand %p182, %p183
      %p185 = pneg %p184
      // Predicated region
      $region25: #{tpu_custom_call.1} parent=5 // pred_check
        _
      $region26: #{tpu_custom_call.1} parent=5 // pred_check_branch
        %187 = sbr.rel (%p184) target = $region28
      $region27: #{tpu_custom_call.1} parent=5 // pred_region
        %s188 = ssub.s32 %s14, 1
        %s189 = sand.u32 %s41, 1
        %s190 = scalar_lea.sflag [#allocation5], %s189
        %s191 = sand.u32 %s41, 1
        %s192 = smul.addr %s191, 16
        %s193 = scalar_lea.vmem [#allocation4], %s192
        // Predicated region
        $region29: #{tpu_custom_call.1} parent=27 // pred_check
          %p194 = pneg %p54
        $region30: #{tpu_custom_call.1} parent=27 // pred_check_branch
          %196 = sbr.rel (%p194) target = $region32
        $region31: #{tpu_custom_call.1} parent=27 // pred_region
          %197 = dma.done %s190, 256
        $region32: #{tpu_custom_call.1} parent=27 // pred_fallthru
          _
        // Predicated region
        $region33: #{tpu_custom_call.1} parent=27 // pred_check
          %p198 = pneg %p75
        $region34: #{tpu_custom_call.1} parent=27 // pred_check_branch
          %200 = sbr.rel (%p198) target = $region36
        $region35: #{tpu_custom_call.1} parent=27 // pred_region
          %201 = dma.done [#allocation7], 192
        $region36: #{tpu_custom_call.1} parent=27 // pred_fallthru
          _
        %s202 = sand.u32 %s41, 1
        %s203 = scalar_lea.sflag [#allocation5], %s202
        %s204 = sand.u32 %s41, 1
        %s205 = smul.addr %s204, 16
        %s206 = scalar_lea.vmem [#allocation4], %s205
        %p207 = pneg %p54
        %p208 = pneg %p51
        %p209 = pneg %p75
        %p210 = pneg %p72
        %p211 = pneg %p101
        %p212 = pneg %p98
        %p213 = scmp.lt.s32.totalorder %s23, 1
        %s214 = scalar_select %p213, %s23, 1
        %s215 = smul.addr %s214, 8
        %s216 = scalar_lea.vmem %s2, %s215
        %p217 = pneg %p127
        %p218 = pneg %p124
        %p219 = scmp.lt.s32.totalorder %s23, 1
        %s220 = scalar_select %p219, %s23, 1
        %s221 = smul.addr %s220, 8
        %s222 = scalar_lea.vmem %s3, %s221
        %p223 = scmp.lt.s32.totalorder %s23, 1
        %s224 = scalar_select %p223, %s23, 1
        %s225 = smul.addr %s224, 8
        %s226 = scalar_lea.vmem %s2, %s225
        %p227 = scmp.lt.s32.totalorder %s23, 1
        %s228 = scalar_select %p227, %s23, 1
        %s229 = smul.addr %s228, 8
        %s230 = scalar_lea.vmem %s3, %s229
        %p232 = scmp.eq.s32.totalorder %s24, 0
        // Predicated region
        $region37: #{tpu_custom_call.1} parent=27 // pred_check
          %p233 = pneg %p232
        $region38: #{tpu_custom_call.1} parent=27 // pred_check_branch
          %235 = sbr.rel (%p233) target = $region40
        $region39: #{tpu_custom_call.1} parent=27 // pred_region
          %236 = vst [vmem:[#allocation2] sm:$0xff] 0.0
          %237 = vst [vmem:[#allocation3] sm:$0xff] 0.0
        $region40: #{tpu_custom_call.1} parent=27 // pred_fallthru
          _
        %v238 = vld [vmem:[%s193] sm:$0xf]
        %v239 = vld [vmem:[%s193 + $0x8] sm:$0xf]
        %v240 = vld [vmem:[#allocation6] sm:$0xf]
        %v241 = vld [vmem:[%s193] sm:$0xff]
        %v242 = vld [vmem:[%s193 + $0x8] sm:$0xff]
        %s243 = scalar_lea.vmem [#allocation6], 4
        %v244 = vld [vmem:[%s243] sm:$0xf]
        %v247 = vunpack.c.l.b16 %v241
        %v248 = vunpack.c.h.b16 %v241
        %v249 = vunpack.c.l.b16 %v242
        %v250 = vunpack.c.h.b16 %v242
        %v251 = vpack.c.b16 %v249, %v247
        %v252 = vpack.c.b16 %v250, %v248
        %253 = vrot.lane.b32.xlu0 %v251, 127
        %v254 = vpop.permute.xlu0 %253
        %255 = vrot.lane.b32.xlu0 %v252, 127
        %v256 = vpop.permute.xlu0 %255
        %vm257 = vcmask 1039360
        %v258 = vsel %vm257, %v254, %v256
        %vm260 = vcmask 130048
        %v262 = vsel %vm260, %v244, 0
        %264 = vmatprep.subr.bf16.mxu0 0
        %265 = vmatpush1.bf16.msra.mxu0 0
        %266 = vmatprep.subr.bf16.mxu0 0
        %267 = vmatpush1.bf16.msra.mxu0 0
        %268 = vmatprep.subr.bf16.mxu0 0
        %269 = vmatpush1.bf16.msra.mxu0 0
        %270 = vmatprep.subr.bf16.mxu0 0
        %271 = vmatpush1.bf16.msra.mxu0 0
        %272 = vmatprep.subr.bf16.mxu0 0
        %273 = vmatpush1.bf16.msra.mxu0 0
        %274 = vmatprep.subr.bf16.mxu0 0
        %275 = vmatpush1.bf16.msra.mxu0 0
        %276 = vmatprep.subr.bf16.mxu0 0
        %277 = vmatpush1.bf16.msra.mxu0 0
        %278 = vmatprep.subr.bf16.mxu0 0
        %279 = vmatpush1.bf16.msra.mxu0 %v258
        %280 = vmatprep.subr.bf16.mxu0 0
        %281 = vmatpush2.bf16.msra.mxu0 0
        %282 = vmatprep.subr.bf16.mxu0 0
        %283 = vmatpush2.bf16.msra.mxu0 0
        %284 = vmatprep.subr.bf16.mxu0 0
        %285 = vmatpush2.bf16.msra.mxu0 0
        %286 = vmatprep.subr.bf16.mxu0 0
        %287 = vmatpush2.bf16.msra.mxu0 0
        %288 = vmatprep.subr.bf16.mxu0 0
        %289 = vmatpush2.bf16.msra.mxu0 0
        %290 = vmatprep.subr.bf16.mxu0 0
        %291 = vmatpush2.bf16.msra.mxu0 0
        %292 = vmatprep.subr.bf16.mxu0 0
        %293 = vmatpush2.bf16.msra.mxu0 0
        %294 = vmatprep.subr.bf16.mxu0 0
        %295 = vmatpush2.bf16.msra.mxu0 0
        %296 = vmatprep.mubr.bf16.mxu0 0
        %297 = vmatmul.mubr.bf16.gmra.mxu0 %v262
        %v298 = vpop.f32.mrf.mxu0
        %v299 = vadd.f32 0.0, %v298
        %v300 = vpop.f32.mrf.mxu0
        %v301 = vpop.f32.mrf.mxu0
        %v302 = vpop.f32.mrf.mxu0
        %303 = vdwg.mxu0
        %v306 = vunpack.c.l.b16 %v238
        %v307 = vunpack.c.l.b16 %v239
        %v308 = vpack.c.b16 %v307, %v306
        %v311 = vsel %vm260, %v240, 0
        %313 = vmatprep.subr.bf16.mxu0 0
        %314 = vmatpush1.bf16.msra.mxu0 0
        %315 = vmatprep.subr.bf16.mxu0 0
        %316 = vmatpush1.bf16.msra.mxu0 0
        %317 = vmatprep.subr.bf16.mxu0 0
        %318 = vmatpush1.bf16.msra.mxu0 0
        %319 = vmatprep.subr.bf16.mxu0 0
        %320 = vmatpush1.bf16.msra.mxu0 0
        %321 = vmatprep.subr.bf16.mxu0 0
        %322 = vmatpush1.bf16.msra.mxu0 0
        %323 = vmatprep.subr.bf16.mxu0 0
        %324 = vmatpush1.bf16.msra.mxu0 0
        %325 = vmatprep.subr.bf16.mxu0 0
        %326 = vmatpush1.bf16.msra.mxu0 0
        %327 = vmatprep.subr.bf16.mxu0 0
        %328 = vmatpush1.bf16.msra.mxu0 %v308
        %329 = vmatprep.subr.bf16.mxu0 0
        %330 = vmatpush2.bf16.msra.mxu0 0
        %331 = vmatprep.subr.bf16.mxu0 0
        %332 = vmatpush2.bf16.msra.mxu0 0
        %333 = vmatprep.subr.bf16.mxu0 0
        %334 = vmatpush2.bf16.msra.mxu0 0
        %335 = vmatprep.subr.bf16.mxu0 0
        %336 = vmatpush2.bf16.msra.mxu0 0
        %337 = vmatprep.subr.bf16.mxu0 0
        %338 = vmatpush2.bf16.msra.mxu0 0
        %339 = vmatprep.subr.bf16.mxu0 0
        %340 = vmatpush2.bf16.msra.mxu0 0
        %341 = vmatprep.subr.bf16.mxu0 0
        %342 = vmatpush2.bf16.msra.mxu0 0
        %343 = vmatprep.subr.bf16.mxu0 0
        %344 = vmatpush2.bf16.msra.mxu0 0
        %345 = vmatprep.mubr.bf16.mxu0 0
        %346 = vmatmul.mubr.bf16.gmra.mxu0 %v311
        %v347 = vpop.f32.mrf.mxu0
        %v348 = vadd.f32 %v299, %v347
        %v349 = vpop.f32.mrf.mxu0
        %v350 = vpop.f32.mrf.mxu0
        %v351 = vpop.f32.mrf.mxu0
        %352 = vdwg.mxu0
        %s353 = scalar_lea.vmem [#allocation6], 8
        %v354 = vld [vmem:[%s353] sm:$0xf]
        %355 = vrot.lane.b32.xlu0 %v251, 126
        %v356 = vpop.permute.xlu0 %355
        %357 = vrot.lane.b32.xlu0 %v252, 126
        %v358 = vpop.permute.xlu0 %357
        %vm359 = vcmask 1031168
        %v360 = vsel %vm359, %v356, %v358
        %v363 = vsel %vm260, %v354, 0
        %365 = vmatprep.subr.bf16.mxu0 0
        %366 = vmatpush1.bf16.msra.mxu0 0
        %367 = vmatprep.subr.bf16.mxu0 0
        %368 = vmatpush1.bf16.msra.mxu0 0
        %369 = vmatprep.subr.bf16.mxu0 0
        %370 = vmatpush1.bf16.msra.mxu0 0
        %371 = vmatprep.subr.bf16.mxu0 0
        %372 = vmatpush1.bf16.msra.mxu0 0
        %373 = vmatprep.subr.bf16.mxu0 0
        %374 = vmatpush1.bf16.msra.mxu0 0
        %375 = vmatprep.subr.bf16.mxu0 0
        %376 = vmatpush1.bf16.msra.mxu0 0
        %377 = vmatprep.subr.bf16.mxu0 0
        %378 = vmatpush1.bf16.msra.mxu0 0
        %379 = vmatprep.subr.bf16.mxu0 0
        %380 = vmatpush1.bf16.msra.mxu0 %v360
        %381 = vmatprep.subr.bf16.mxu0 0
        %382 = vmatpush2.bf16.msra.mxu0 0
        %383 = vmatprep.subr.bf16.mxu0 0
        %384 = vmatpush2.bf16.msra.mxu0 0
        %385 = vmatprep.subr.bf16.mxu0 0
        %386 = vmatpush2.bf16.msra.mxu0 0
        %387 = vmatprep.subr.bf16.mxu0 0
        %388 = vmatpush2.bf16.msra.mxu0 0
        %389 = vmatprep.subr.bf16.mxu0 0
        %390 = vmatpush2.bf16.msra.mxu0 0
        %391 = vmatprep.subr.bf16.mxu0 0
        %392 = vmatpush2.bf16.msra.mxu0 0
        %393 = vmatprep.subr.bf16.mxu0 0
        %394 = vmatpush2.bf16.msra.mxu0 0
        %395 = vmatprep.subr.bf16.mxu0 0
        %396 = vmatpush2.bf16.msra.mxu0 0
        %397 = vmatprep.mubr.bf16.mxu0 0
        %398 = vmatmul.mubr.bf16.gmra.mxu0 %v363
        %v399 = vpop.f32.mrf.mxu0
        %v400 = vadd.f32 0.0, %v399
        %v401 = vpop.f32.mrf.mxu0
        %v402 = vpop.f32.mrf.mxu0
        %v403 = vpop.f32.mrf.mxu0
        %404 = vdwg.mxu0
        %v405 = vadd.f32 %v348, %v400
        %v406 = vlaneseq
        %v407 = vand.u32 %v406, 127
        %s408 = smul.u32 %s24, 128
        %v409 = vstv %s408
        %v410 = vadd.s32 %v409, %v407
        %vm411 = vcmp.lt.s32.totalorder %v410, 16
        %v412 = vsel %vm411, %v405, 0.0
        %v413 = vld [vmem:[#allocation2] sm:$0xff]
        %v414 = vadd.f32 %v413, %v412
        %415 = vst [vmem:[#allocation2] sm:$0xff] %v414
        %v416 = vld [vmem:[#allocation3] sm:$0xff]
        %v417 = vmul.f32 %v412, %v412
        %v418 = vadd.f32 %v416, %v417
        %419 = vst [vmem:[#allocation3] sm:$0xff] %v418
        // Predicated region
        $region41: #{tpu_custom_call.1} parent=27 // pred_check
          %p420 = pneg %p232
        $region42: #{tpu_custom_call.1} parent=27 // pred_check_branch
          %422 = sbr.rel (%p420) target = $region44
        $region43: #{tpu_custom_call.1} parent=27 // pred_region
          %v423 = vld [vmem:[#allocation2] sm:$0xff]
          %424 = vadd.xlane.f32.xlu0 %v423
          %v425 = vpop.xlane.xlu0 %424
          %vm426 = vcmask 7168
          %427 = vst.msk [vmem:[%s226] sm:$0xff] %vm426, %v425
          %v428 = vld [vmem:[#allocation3] sm:$0xff]
          %429 = vadd.xlane.f32.xlu0 %v428
          %v430 = vpop.xlane.xlu0 %429
          %431 = vst.msk [vmem:[%s230] sm:$0xff] %vm426, %v430
        $region44: #{tpu_custom_call.1} parent=27 // pred_fallthru
          _
        %p432 = scmp.lt.s32.totalorder %s23, 1
        %s433 = scalar_select %p432, %s23, 1
        %s434 = smul.addr %s433, 8
        %s435 = scalar_lea.vmem %s2, %s434
        %p436 = scmp.lt.s32.totalorder %s23, 1
        %s437 = scalar_select %p436, %s23, 1
        %s438 = smul.addr %s437, 8
        %s439 = scalar_lea.vmem %s3, %s438
        // Predicated region
        $region45: #{tpu_custom_call.1} parent=27 // pred_check
          %p440 = pneg %p98
        $region46: #{tpu_custom_call.1} parent=27 // pred_check_branch
          %442 = sbr.rel (%p440) target = $region48
        $region47: #{tpu_custom_call.1} parent=27 // pred_region
          _
        $region48: #{tpu_custom_call.1} parent=27 // pred_fallthru
          _
        // Predicated region
        $region49: #{tpu_custom_call.1} parent=27 // pred_check
          %p443 = pneg %p124
        $region50: #{tpu_custom_call.1} parent=27 // pred_check_branch
          %445 = sbr.rel (%p443) target = $region52
        $region51: #{tpu_custom_call.1} parent=27 // pred_region
          _
        $region52: #{tpu_custom_call.1} parent=27 // pred_fallthru
          _
      $region28: #{tpu_custom_call.1} parent=5 // pred_fallthru
        _
      %p446 = scmp.le.s32.totalorder 2, %s14
      // Predicated region
      $region53: #{tpu_custom_call.1} parent=5 // pred_check
        %p447 = pneg %p446
      $region54: #{tpu_custom_call.1} parent=5 // pred_check_branch
        %449 = sbr.rel (%p447) target = $region56
      $region55: #{tpu_custom_call.1} parent=5 // pred_region
        %s450 = ssub.s32 %s14, 2
        // Predicated region
        $region57: #{tpu_custom_call.1} parent=55 // pred_check
          %p451 = pneg %p104
        $region58: #{tpu_custom_call.1} parent=55 // pred_check_branch
          %453 = sbr.rel (%p451) target = $region60
        $region59: #{tpu_custom_call.1} parent=55 // pred_region
          %p454 = scmp.lt.s32.totalorder %s25, 1
          %s455 = scalar_select %p454, %s25, 1
          %s456 = smul.addr %s455, 8
          %s457 = scalar_lea.vmem %s2, %s456
        $region60: #{tpu_custom_call.1} parent=55 // pred_fallthru
          _
        // Predicated region
        $region61: #{tpu_custom_call.1} parent=55 // pred_check
          %p458 = pneg %p130
        $region62: #{tpu_custom_call.1} parent=55 // pred_check_branch
          %460 = sbr.rel (%p458) target = $region64
        $region63: #{tpu_custom_call.1} parent=55 // pred_region
          %p461 = scmp.lt.s32.totalorder %s25, 1
          %s462 = scalar_select %p461, %s25, 1
          %s463 = smul.addr %s462, 8
          %s464 = scalar_lea.vmem %s3, %s463
        $region64: #{tpu_custom_call.1} parent=55 // pred_fallthru
          _
      $region56: #{tpu_custom_call.1} parent=5 // pred_fallthru
        _
    $region6: #{tpu_custom_call.1} parent=1 // loop_footer
      %s18 = sadd.s32 1, %s14
    $region7: #{tpu_custom_call.1} parent=1 // loop_footer_branch
      %13 = sbr.rel target = $region3
    $region8: #{tpu_custom_call.1} parent=1 // loop_exit
      _
    %465 = vsyncpa [#allocation5], 1
    %s466 = scalar_lea.sflag [#allocation5], 1
    %467 = vsyncpa %s466, 1
    %468 = vsyncpa [#allocation7], 1

</llo_original>
